<compile_context>
chip_gen: v7x
topology: tpu7x:2x2x1
jax: 0.10.0
libtpu: 0.0.40
codegen_flags: <defaults>
</compile_context>

<pallas_src>
import functools

import jax
import jax.numpy as jnp
from jax import lax
from jax.experimental import pallas as pl
from jax.experimental.pallas import tpu as pltpu


def _round_up(n, m):
    return ((n + m - 1) // m) * m


def _cdiv(a, b):
    return (a + b - 1) // b


def _nodeembedding_kernel(x_ref, w_ref, b_ref, o_ref, *, hidden, p):
    """One row-tile of the folded matvec.

    x_ref : [tm, F]    F = p*hidden lanes (p nodes packed per row when hidden<128)
    w_ref : [1, F]     folded weight row, tiled p times (VMEM resident, constant map)
    b_ref : [1, 1]     folded bias scalar (SMEM)
    o_ref : [1, p, tm] transposed, lane-dense output tile
    """
    x = x_ref[...].astype(jnp.float32)          # bf16 streaming upcasts here (no-op for f32)
    prod = x * w_ref[...]                       # VPU multiply, exact f32
    # Segmented lane reduction: node j of a packed row occupies lanes
    # [j*hidden, (j+1)*hidden).  p is a small static int -> unrolled.
    parts = []
    for j in range(p):
        seg = prod[:, j * hidden:(j + 1) * hidden]
        parts.append(jnp.sum(seg, axis=-1, keepdims=True))       # XLU lane reduce, [tm, 1]
    y = parts[0] if p == 1 else jnp.concatenate(parts, axis=-1)  # [tm, p]
    y = y + b_ref[0, 0]
    # Lane-dense store: long axis (tm) on lanes -> unmasked vst instead of vst.msk.
    o_ref[0] = jnp.transpose(y).astype(o_ref.dtype)


@functools.partial(jax.jit, static_argnames=("tile_bytes",))
def nodeembedding_forward(x, w1, b1, w2, b2, *, tile_bytes=8 * 1024 * 1024):
    """x: [N, hidden]; w1: [out, hidden]; b1: [out]; w2: [1, out]; b2: [1]."""
    N, hidden = x.shape

    # ---- fold the two Linear layers (valid: no activation between them) ---------
    w_row = jnp.dot(w2, w1, precision=lax.Precision.HIGHEST).astype(jnp.float32)   # [1, hidden]
    b_eff = (jnp.dot(w2, b1[:, None], precision=lax.Precision.HIGHEST)
             + b2[:, None]).astype(jnp.float32)                                    # [1, 1]

    # ---- lane packing: view x as [R, F] with F a full 128-lane row when possible --
    if hidden <= 128 and 128 % hidden == 0 and N % (128 // hidden) == 0:
        p = 128 // hidden          # nodes packed per 128-lane row
    else:
        p = 1                      # general fallback (lane-padded blocks, still correct)
    F = hidden * p
    R = N // p
    x_view = x.reshape(R, F)                                   # free (row-major) reshape
    w_tiled = jnp.tile(w_row, (1, p)) if p > 1 else w_row      # [1, F]

    # ---- byte-based row tile: ~tile_bytes per (double-buffered) input buffer ------
    itemsize = x.dtype.itemsize
    vmem_row_bytes = _round_up(F, 128) * 4                     # conservative (f32, lane-padded)
    tm = max(8, (tile_bytes // vmem_row_bytes) // 8 * 8)
    tm = min(tm, _round_up(R, 8))
    if _cdiv(R, tm) < 2 and R > 8:                             # give both v7x cores work
        tm = max(8, _round_up(_cdiv(R, 2), 8))
    num_tiles = _cdiv(R, tm)

    # ---- explicit VMEM budget (covers v5e 16 MiB / v7x 32 MiB scoped defaults) ----
    in_buf = tm * vmem_row_bytes
    out_buf = _round_up(p, 8) * _round_up(tm, 128) * 4
    w_buf = _round_up(F, 128) * 4
    vmem_limit = 2 * in_buf + 2 * out_buf + 2 * w_buf + (4 << 20)
    vmem_limit = int(min(max(vmem_limit, 32 << 20), 56 << 20))

    cost = pl.CostEstimate(
        flops=2 * N * hidden,
        transcendentals=0,
        bytes_accessed=N * hidden * itemsize + N * itemsize + F * 4 + 4,
    )

    out = pl.pallas_call(
        functools.partial(_nodeembedding_kernel, hidden=hidden, p=p),
        out_shape=jax.ShapeDtypeStruct((num_tiles, p, tm), x.dtype),
        grid_spec=pltpu.PrefetchScalarGridSpec(
            num_scalar_prefetch=0,
            grid=(num_tiles,),
            in_specs=[
                # x: tiled over packed rows, pipelined (double-buffered) over the grid.
                # Last (partial) tile reads undefined rows -> garbage only in rows that
                # are sliced off below (per-row independent compute), so no jnp.pad.
                pl.BlockSpec((tm, F), lambda i: (i, 0)),
                # folded weight row: constant index_map -> stays resident in VMEM
                pl.BlockSpec((1, F), lambda i: (0, 0)),
                # folded bias scalar: whole array in SMEM (no VMEM tile / DMA)
                pl.BlockSpec(memory_space=pltpu.MemorySpace.SMEM),
            ],
            out_specs=pl.BlockSpec((1, p, tm), lambda i: (i, 0, 0)),
        ),
        compiler_params=pltpu.CompilerParams(
            dimension_semantics=("parallel",),       # megacore sharding on v7x
            vmem_limit_bytes=vmem_limit,
        ),
        cost_estimate=cost,
    )(x_view, w_tiled, b_eff)

    # out[i, j, r] holds node (i*tm + r)*p + j -> order by (i, r, j) and slice tail.
    y = jnp.transpose(out, (0, 2, 1)).reshape(num_tiles * tm * p)[:N]
    return y.reshape(N, 1)


def _reference(x, w1, b1, w2, b2):
    h = jnp.dot(x, w1.T, precision=lax.Precision.HIGHEST) + b1
    return jnp.dot(h, w2.T, precision=lax.Precision.HIGHEST) + b2


if __name__ == "__main__":
    # Shapes implied by the module: nodeembedding(hidden_channels, out_channels)
    # applied to node features of shape [num_nodes, hidden_channels].
    hidden_channels = 32
    out_channels = 16

    key = jax.random.PRNGKey(0)
    kx, kw1, kb1, kw2, kb2, kx2, kx3 = jax.random.split(key, 7)

    bound1 = 1.0 / (hidden_channels ** 0.5)
    w1 = jax.random.uniform(kw1, (out_channels, hidden_channels),
                            minval=-bound1, maxval=bound1, dtype=jnp.float32)
    b1 = jax.random.uniform(kb1, (out_channels,),
                            minval=-bound1, maxval=bound1, dtype=jnp.float32)
    bound2 = 1.0 / (out_channels ** 0.5)
    w2 = jax.random.uniform(kw2, (1, out_channels),
                            minval=-bound2, maxval=bound2, dtype=jnp.float32)
    b2 = jax.random.uniform(kb2, (1,),
                            minval=-bound2, maxval=bound2, dtype=jnp.float32)

    # 1) primary small case (packed path, single tile)
    x = jax.random.normal(kx, (8, hidden_channels), dtype=jnp.float32)
    out = jax.block_until_ready(nodeembedding_forward(x, w1, b1, w2, b2))
    ref = _reference(x, w1, b1, w2, b2)
    assert out.shape == (8, 1)
    assert jnp.allclose(out, ref, atol=1e-5, rtol=1e-5)

    # 2) ragged N (general fallback path, partial last tile, no padding pass)
    x2 = jax.random.normal(kx2, (13, hidden_channels), dtype=jnp.float32)
    out2 = jax.block_until_ready(nodeembedding_forward(x2, w1, b1, w2, b2))
    assert out2.shape == (13, 1)
    assert jnp.allclose(out2, _reference(x2, w1, b1, w2, b2), atol=1e-5, rtol=1e-5)

    # 3) multi-tile packed path (exercises resident weight + output reordering)
    x3 = jax.random.normal(kx3, (256, hidden_channels), dtype=jnp.float32)
    out3 = jax.block_until_ready(nodeembedding_forward(x3, w1, b1, w2, b2))
    assert out3.shape == (256, 1)
    assert jnp.allclose(out3, _reference(x3, w1, b1, w2, b2), atol=1e-5, rtol=1e-5)

    print("KERNEL_OK")
</pallas_src>

<mosaic_0001>
module attributes {stable_mosaic.version = 11 : i64} {
  func.func @_nodeembedding_kernel(%arg0: i32, %arg1: memref<8x128xf32, #tpu.memory_space<vmem>>, %arg2: memref<1x128xf32, #tpu.memory_space<vmem>>, %arg3: memref<1x1xf32, #tpu.memory_space<smem>>, %arg4: memref<1x4x8xf32, #tpu.memory_space<vmem>>) attributes {dimension_semantics = [#tpu.dimension_semantics<parallel>], iteration_bounds = array<i64: 1>, scalar_prefetch = 0 : i64, scratch_operands = 0 : i64, tpu.core_type = #tpu.core_type<tc>, window_params = [{transform_indices = @transform_0, window_bounds = array<i64: 8, 128>}, {pipeline_mode = #tpu.pipeline_mode<synchronous>, transform_indices = @transform_1, window_bounds = array<i64: 1, 128>}, {transform_indices = @transform_2, window_bounds = array<i64: 1, 1>}, {transform_indices = @transform_3, window_bounds = array<i64: 1, 4, 8>}]} {
    %c0 = arith.constant 0 : index
    %c0_0 = arith.constant 0 : index
    %0 = vector.load %arg1[%c0, %c0_0] : memref<8x128xf32, #tpu.memory_space<vmem>>, vector<8x128xf32>
    %c0_1 = arith.constant 0 : index
    %c0_2 = arith.constant 0 : index
    %1 = vector.load %arg2[%c0_1, %c0_2] : memref<1x128xf32, #tpu.memory_space<vmem>>, vector<1x128xf32>
    %2 = vector.broadcast %1 : vector<1x128xf32> to vector<8x128xf32>
    %3 = arith.mulf %0, %2 : vector<8x128xf32>
    %4 = vector.extract_strided_slice %3 {offsets = [0, 0], sizes = [8, 32], strides = [1, 1]} : vector<8x128xf32> to vector<8x32xf32>
    %cst = arith.constant dense<0.000000e+00> : vector<8xf32>
    %5 = vector.multi_reduction <add>, %4, %cst [1] : vector<8x32xf32> to vector<8xf32>
    %6 = vector.shape_cast %5 : vector<8xf32> to vector<8x1xf32>
    %7 = vector.extract_strided_slice %3 {offsets = [0, 32], sizes = [8, 32], strides = [1, 1]} : vector<8x128xf32> to vector<8x32xf32>
    %cst_3 = arith.constant dense<0.000000e+00> : vector<8xf32>
    %8 = vector.multi_reduction <add>, %7, %cst_3 [1] : vector<8x32xf32> to vector<8xf32>
    %9 = vector.shape_cast %8 : vector<8xf32> to vector<8x1xf32>
    %10 = vector.extract_strided_slice %3 {offsets = [0, 64], sizes = [8, 32], strides = [1, 1]} : vector<8x128xf32> to vector<8x32xf32>
    %cst_4 = arith.constant dense<0.000000e+00> : vector<8xf32>
    %11 = vector.multi_reduction <add>, %10, %cst_4 [1] : vector<8x32xf32> to vector<8xf32>
    %12 = vector.shape_cast %11 : vector<8xf32> to vector<8x1xf32>
    %13 = vector.extract_strided_slice %3 {offsets = [0, 96], sizes = [8, 32], strides = [1, 1]} : vector<8x128xf32> to vector<8x32xf32>
    %cst_5 = arith.constant dense<0.000000e+00> : vector<8xf32>
    %14 = vector.multi_reduction <add>, %13, %cst_5 [1] : vector<8x32xf32> to vector<8xf32>
    %15 = vector.shape_cast %14 : vector<8xf32> to vector<8x1xf32>
    %16 = tpu.concatenate %6, %9, %12, %15 in 1 : vector<8x1xf32>, vector<8x1xf32>, vector<8x1xf32>, vector<8x1xf32> -> vector<8x4xf32>
    %c0_6 = arith.constant 0 : index
    %c0_7 = arith.constant 0 : index
    %17 = memref.load %arg3[%c0_6, %c0_7] : memref<1x1xf32, #tpu.memory_space<smem>>
    %18 = vector.broadcast %17 : f32 to vector<8x4xf32>
    %19 = arith.addf %16, %18 : vector<8x4xf32>
    %20 = tpu.transpose %19, [1, 0] : vector<8x4xf32> -> vector<4x8xf32>
    %c0_8 = arith.constant 0 : index
    %c0_9 = arith.constant 0 : index
    %c0_10 = arith.constant 0 : index
    %21 = vector.load %arg4[%c0_8, %c0_9, %c0_10] : memref<1x4x8xf32, #tpu.memory_space<vmem>>, vector<1x4x8xf32>
    %22 = vector.shape_cast %21 : vector<1x4x8xf32> to vector<4x8xf32>
    %23 = vector.shape_cast %20 : vector<4x8xf32> to vector<1x4x8xf32>
    tpu.vector_store %arg4[%c0_8, %c0_9, %c0_10], %23 {strides = array<i32>} : memref<1x4x8xf32, #tpu.memory_space<vmem>>, vector<1x4x8xf32>,
    return
  }
  func.func @transform_0(%arg0: i32) -> (i32, i32) {
    %c0_i32 = arith.constant 0 : i32
    %c0_i32_0 = arith.constant 0 : i32
    return %arg0, %c0_i32 : i32, i32
  }
  func.func @transform_1(%arg0: i32) -> (i32, i32) {
    %c0_i32 = arith.constant 0 : i32
    %c0_i32_0 = arith.constant 0 : i32
    %c0_i32_1 = arith.constant 0 : i32
    return %c0_i32, %c0_i32_0 : i32, i32
  }
  func.func @transform_2(%arg0: i32) -> (i32, i32) {
    %c0_i32 = arith.constant 0 : i32
    %c0_i32_0 = arith.constant 0 : i32
    %c0_i32_1 = arith.constant 0 : i32
    return %c0_i32, %c0_i32_0 : i32, i32
  }
  func.func @transform_3(%arg0: i32) -> (i32, i32, i32) {
    %c0_i32 = arith.constant 0 : i32
    %c0_i32_0 = arith.constant 0 : i32
    %c0_i32_1 = arith.constant 0 : i32
    return %arg0, %c0_i32, %c0_i32_0 : i32, i32, i32
  }
}

</mosaic_0001>

<llo_original>
// kernel: nodeembedding_forward.1
$region0: #{nodeembedding_forward.1}
  #allocation0 [shape = 'u32[]', space=smem, size = 0x4, offset = 0x4, fixed_abs, tag = 'smem constant byte address 0x4 - core index']
  #allocation1 [shape = 'u32[144,128]{1,0:T(1,128)}', space=vmem, size = 0x12000, scoped, tag = 'internal scratch']
  #allocation2 [shape = 'f32[1,1]{1,0:T(1,128)S(6)}', space=smem, size = 0x200, scoped, tag = 'scoped memory for nodeembedding_forward.1']
  %s0 = inlined_call_operand.vmem [shape: f32[2,128], index: 0, kind: input, shape index: {}]
  %s1 = inlined_call_operand.vmem [shape: f32[1,128], index: 1, kind: input, shape index: {}]
  %s2 = inlined_call_operand.<no memory space> [shape: f32[1,1], index: 2, kind: input, shape index: {}]
  %s3 = inlined_call_operand.vmem [shape: f32[1,4,8], index: 3, kind: output, shape index: {}]
  %s4 = sld [smem:[#allocation0]]
  $region22: #{nodeembedding_forward.1} parent=0
    _
  %s6 = ssub.s32 1, %s4
  %s7 = scalar_select 0, %s6, %s4
  %8 = sst [smem:[#allocation2]] %s2
  // Predicated region
  $region2: #{nodeembedding_forward.1} parent=0 // pred_check
    _
  $region3: #{nodeembedding_forward.1} parent=0 // pred_check_branch
    %10 = sbr.rel (0) target = $region5
  $region4: #{nodeembedding_forward.1} parent=0 // pred_region
    _
  $region5: #{nodeembedding_forward.1} parent=0 // pred_fallthru
    _
  // Predicated region
  $region6: #{nodeembedding_forward.1} parent=0 // pred_check
    _
  $region7: #{nodeembedding_forward.1} parent=0 // pred_check_branch
    %12 = sbr.rel (0) target = $region9
  $region8: #{nodeembedding_forward.1} parent=0 // pred_region
    _
  $region9: #{nodeembedding_forward.1} parent=0 // pred_fallthru
    _
  // Predicated region
  $region10: #{nodeembedding_forward.1} parent=0 // pred_check
    _
  $region11: #{nodeembedding_forward.1} parent=0 // pred_check_branch
    %14 = sbr.rel (0) target = $region13
  $region12: #{nodeembedding_forward.1} parent=0 // pred_region
    _
  $region13: #{nodeembedding_forward.1} parent=0 // pred_fallthru
    _
  %v15 = vld [vmem:[%s0] sm:$0xff]
  %v16 = vld [vmem:[%s1] sm:$0x1]
  %v18 = vlaneseq
  %v19 = vshrl.u32 %v18, 7
  %v20 = vsub.s32 0, %v19
  %v21 = vrot.slane %v16, %v20
  %v23 = vmul.f32 %v15, %v21
  %vm24 = vcmask 261120
  %v25 = vsel %vm24, %v23, 0.0
  %26 = vadd.xlane.f32.xlu0 %v25
  %v27 = vpop.xlane.xlu0 %26
  %29 = vrot.lane.b32.xlu0 %v23, 96
  %v30 = vpop.permute.xlu0 %29
  %v32 = vsel %vm24, %v30, 0.0
  %33 = vadd.xlane.f32.xlu0 %v32
  %v34 = vpop.xlane.xlu0 %33
  %35 = vrot.lane.b32.xlu0 %v23, 64
  %v36 = vpop.permute.xlu0 %35
  %v38 = vsel %vm24, %v36, 0.0
  %39 = vadd.xlane.f32.xlu0 %v38
  %v40 = vpop.xlane.xlu0 %39
  %41 = vrot.lane.b32.xlu0 %v23, 32
  %v42 = vpop.permute.xlu0 %41
  %v44 = vsel %vm24, %v42, 0.0
  %45 = vadd.xlane.f32.xlu0 %v44
  %v46 = vpop.xlane.xlu0 %45
  %vm47 = vcmask 7168
  %v48 = vsel %vm47, %v27, %v34
  %vm49 = vcmask 15360
  %v50 = vsel %vm49, %v48, %v40
  %vm51 = vcmask 23552
  %v52 = vsel %vm51, %v50, %v46
  %s53 = sld [smem:[#allocation2]]
  %v54 = vstv %s53
  %v55 = vadd.f32 %v52, %v54
  %56 = vxpose.xlu0.b32.start [1/16] %v55, 128
  %57 = vxpose.xlu0.b32.cont [2/16] 0.0, 128
  %58 = vxpose.xlu0.b32.cont [3/16] 0.0, 128
  %59 = vxpose.xlu0.b32.cont [4/16] 0.0, 128
  %60 = vxpose.xlu0.b32.cont [5/16] 0.0, 128
  %61 = vxpose.xlu0.b32.cont [6/16] 0.0, 128
  %62 = vxpose.xlu0.b32.cont [7/16] 0.0, 128
  %63 = vxpose.xlu0.b32.cont [8/16] 0.0, 128
  %64 = vxpose.xlu0.b32.cont [9/16] 0.0, 128
  %65 = vxpose.xlu0.b32.cont [10/16] 0.0, 128
  %66 = vxpose.xlu0.b32.cont [11/16] 0.0, 128
  %67 = vxpose.xlu0.b32.cont [12/16] 0.0, 128
  %68 = vxpose.xlu0.b32.cont [13/16] 0.0, 128
  %69 = vxpose.xlu0.b32.cont [14/16] 0.0, 128
  %70 = vxpose.xlu0.b32.cont [15/16] 0.0, 128
  %71 = vxpose.xlu0.b32.end [16/16] 0.0, 128
  %v72 = vpop.trf.xlu0
  %v73 = vpop.trf.xlu0
  %v74 = vpop.trf.xlu0
  %v75 = vpop.trf.xlu0
  %v76 = vpop.trf.xlu0
  %v77 = vpop.trf.xlu0
  %v78 = vpop.trf.xlu0
  %v79 = vpop.trf.xlu0
  %v80 = vpop.trf.xlu0
  %v81 = vpop.trf.xlu0
  %v82 = vpop.trf.xlu0
  %v83 = vpop.trf.xlu0
  %v84 = vpop.trf.xlu0
  %v85 = vpop.trf.xlu0
  %v86 = vpop.trf.xlu0
  %v87 = vpop.trf.xlu0
  %vm88 = vcmask 60416
  %89 = vst.msk [vmem:[%s3] sm:$0xf] %vm88, %v72
  // Predicated region
  $region14: #{nodeembedding_forward.1} parent=0 // pred_check
    _
  $region15: #{nodeembedding_forward.1} parent=0 // pred_check_branch
    %91 = sbr.rel (0) target = $region17
  $region16: #{nodeembedding_forward.1} parent=0 // pred_region
    _
  $region17: #{nodeembedding_forward.1} parent=0 // pred_fallthru
    _
  // Predicated region
  $region18: #{nodeembedding_forward.1} parent=0 // pred_check
    _
  $region19: #{nodeembedding_forward.1} parent=0 // pred_check_branch
    %93 = sbr.rel (0) target = $region21
  $region20: #{nodeembedding_forward.1} parent=0 // pred_region
    _
  $region21: #{nodeembedding_forward.1} parent=0 // pred_fallthru
    _

</llo_original>
